<compile_context>
chip_gen: v7x
topology: tpu7x:2x2x1
jax: 0.10.0
libtpu: 0.0.40
codegen_flags: <defaults>
</compile_context>

<pallas_src>
import jax
import jax.numpy as jnp
from jax.experimental import pallas as pl
from jax.experimental.pallas import tpu as pltpu


# --------------------------------------------------------------------------
# Fast path: trace-time tuple concatenation (exactly what the PyTorch module
# does — no device work, keeps the result a static Python tuple).
# --------------------------------------------------------------------------
def tuple_add(x123):
    """M.forward: operator.add(x123, (4, 64)) — pure Python, zero overhead."""
    return tuple(x123) + (4, 64)


# --------------------------------------------------------------------------
# Minimal Pallas kernel (kept for framework/structural reasons only).
# Constant (4, 64) is baked in as immediates; single SMEM input, SMEM output,
# no grid, no scratch, no pipelining.
# --------------------------------------------------------------------------
def _concat_kernel(x_ref, o_ref):
    # x_ref: SMEM int32[2]  (the input tuple (1, 384))
    # o_ref: SMEM int32[4]  (the concatenated tuple (1, 384, 4, 64))
    o_ref[0] = x_ref[0]
    o_ref[1] = x_ref[1]
    o_ref[2] = jnp.int32(4)   # baked-in constant: no second operand needed
    o_ref[3] = jnp.int32(64)


def tuple_add_on_device(x123):
    """Same semantics as tuple_add, but materialized via a Pallas TPU call."""
    x_arr = jnp.asarray(x123, dtype=jnp.int32)          # shape (2,)
    out = pl.pallas_call(
        _concat_kernel,
        out_shape=jax.ShapeDtypeStruct((4,), jnp.int32),
        in_specs=[pl.BlockSpec(memory_space=pltpu.SMEM)],
        out_specs=pl.BlockSpec(memory_space=pltpu.SMEM),
    )(x_arr)
    return out


if __name__ == "__main__":
    # Deterministic setup; the module's input is the static tuple (1, 384).
    _ = jax.random.PRNGKey(0)
    x123 = (1, 384)

    expected = (1, 384, 4, 64)

    # Primary (trace-time) path — the actual optimization recommended.
    fast = tuple_add(x123)
    assert fast == expected, f"expected {expected}, got {fast}"

    # Pallas path — run once, block, verify identical semantics.
    result = jax.block_until_ready(tuple_add_on_device(x123))
    got = tuple(int(v) for v in result)
    assert got == expected, f"expected {expected}, got {got}"

    print("KERNEL_OK")
</pallas_src>

<mosaic_0001>
module attributes {stable_mosaic.version = 11 : i64} {
  func.func @_concat_kernel(%arg0: memref<2xi32, #tpu.memory_space<smem>>, %arg1: memref<4xi32, #tpu.memory_space<smem>>) attributes {dimension_semantics = [], scalar_prefetch = 0 : i64, scratch_operands = 0 : i64, tpu.core_type = #tpu.core_type<tc>} {
    %c0 = arith.constant 0 : index
    %0 = memref.load %arg0[%c0] : memref<2xi32, #tpu.memory_space<smem>>
    %c0_0 = arith.constant 0 : index
    %1 = memref.load %arg1[%c0_0] : memref<4xi32, #tpu.memory_space<smem>>
    memref.store %0, %arg1[%c0_0] : memref<4xi32, #tpu.memory_space<smem>>
    %c1 = arith.constant 1 : index
    %2 = memref.load %arg0[%c1] : memref<2xi32, #tpu.memory_space<smem>>
    %c1_1 = arith.constant 1 : index
    %3 = memref.load %arg1[%c1_1] : memref<4xi32, #tpu.memory_space<smem>>
    memref.store %2, %arg1[%c1_1] : memref<4xi32, #tpu.memory_space<smem>>
    %c4_i32 = arith.constant 4 : i32
    %c2 = arith.constant 2 : index
    %4 = memref.load %arg1[%c2] : memref<4xi32, #tpu.memory_space<smem>>
    memref.store %c4_i32, %arg1[%c2] : memref<4xi32, #tpu.memory_space<smem>>
    %c64_i32 = arith.constant 64 : i32
    %c3 = arith.constant 3 : index
    %5 = memref.load %arg1[%c3] : memref<4xi32, #tpu.memory_space<smem>>
    memref.store %c64_i32, %arg1[%c3] : memref<4xi32, #tpu.memory_space<smem>>
    return
  }
}

</mosaic_0001>

<llo_original>
// kernel: tpu_custom_call.1
$region0: #{tpu_custom_call.1}
  #allocation0 [shape = 'u32[]', space=smem, size = 0x4, offset = 0x4, fixed_abs, tag = 'smem constant byte address 0x4 - core index']
  #allocation1 [shape = 'u32[144,128]{1,0:T(1,128)}', space=vmem, size = 0x12000, scoped, tag = 'internal scratch']
  %s0 = inlined_call_operand.hbm [shape: s32[2], index: 0, kind: input, shape index: {}]
  %s1 = inlined_call_operand.hbm [shape: s32[4], index: 1, kind: output, shape index: {}]
  %s2 = sld [smem:[#allocation0]]
  $region18: #{tpu_custom_call.1} parent=0
    _
  %s4 = ssub.s32 1, %s2
  %s5 = scalar_select 0, %s4, %s2
  $region1: #{tpu_custom_call.1} parent=0
    #allocation2 [shape = 'u8[512]{0}', space=smem, size = 0x200, scoped, tag = 'input window, operand 0, single buffered']
    #allocation3 [shape = 's32[1]{0}', space=sflag, size = 0x4, scoped, tag = 'scoped memory for tpu_custom_call.1']
    #allocation4 [shape = 's32[1]{0}', space=sflag, size = 0x4, scoped, tag = 'scoped memory for tpu_custom_call.1']
    #allocation5 [shape = 'u8[512]{0}', space=smem, size = 0x200, scoped, tag = 'output window, operand 0, single buffered']
    %6 = vsyncpa [#allocation3], 0
    %7 = vsyncpa [#allocation4], 0
    // Predicated region
    $region2: #{tpu_custom_call.1} parent=1 // pred_check
      _
    $region3: #{tpu_custom_call.1} parent=1 // pred_check_branch
      %9 = sbr.rel (0) target = $region5
    $region4: #{tpu_custom_call.1} parent=1 // pred_region
      %s11 = ssub.s32 16, 16
      %12 = vsyncadd [#allocation3], %s11
      %15 = dma.hbm_to_smem %s0, 16, [#allocation2], [#allocation3]
    $region5: #{tpu_custom_call.1} parent=1 // pred_fallthru
      _
    // Predicated region
    $region6: #{tpu_custom_call.1} parent=1 // pred_check
      _
    $region7: #{tpu_custom_call.1} parent=1 // pred_check_branch
      %17 = sbr.rel (0) target = $region9
    $region8: #{tpu_custom_call.1} parent=1 // pred_region
      %18 = dma.done [#allocation3], 16
    $region9: #{tpu_custom_call.1} parent=1 // pred_fallthru
      _
    %19 = sfence
    %s20 = sld [smem:[#allocation2]]
    %s21 = scalar_lea.smem [#allocation5], 0
    %22 = sst [smem:[%s21]] %s20
    %s23 = sld [smem:[#allocation2 + $0x1]]
    %s24 = scalar_lea.smem [#allocation5], 1
    %25 = sst [smem:[%s24]] %s23
    %s26 = scalar_lea.smem [#allocation5], 2
    %27 = sst [smem:[%s26]] 4
    %s28 = scalar_lea.smem [#allocation5], 3
    %29 = sst [smem:[%s28]] 64
    // Predicated region
    $region10: #{tpu_custom_call.1} parent=1 // pred_check
      _
    $region11: #{tpu_custom_call.1} parent=1 // pred_check_branch
      %31 = sbr.rel (0) target = $region13
    $region12: #{tpu_custom_call.1} parent=1 // pred_region
      %s33 = ssub.s32 16, 16
      %34 = vsyncadd [#allocation4], %s33
      %37 = dma.smem_to_hbm [#allocation5], 16, %s1, [#allocation4]
    $region13: #{tpu_custom_call.1} parent=1 // pred_fallthru
      _
    // Predicated region
    $region14: #{tpu_custom_call.1} parent=1 // pred_check
      _
    $region15: #{tpu_custom_call.1} parent=1 // pred_check_branch
      %39 = sbr.rel (0) target = $region17
    $region16: #{tpu_custom_call.1} parent=1 // pred_region
      %40 = dma.done [#allocation4], 16
    $region17: #{tpu_custom_call.1} parent=1 // pred_fallthru
      _
    %41 = sfence
    %42 = vsyncpa [#allocation3], 1
    %43 = vsyncpa [#allocation4], 1

</llo_original>
